<compile_context>
chip_gen: v5e
topology: v5e:2x2
jax: 0.10.0
libtpu: 0.0.40
codegen_flags: <defaults>
</compile_context>

<pallas_src>
import jax
import jax.numpy as jnp
from jax.experimental import pallas as pl
from jax.experimental.pallas import tpu as pltpu
import numpy as np


def _round_up(x, m):
    return ((x + m - 1) // m) * m


def autoencoder_kernel(x_ref, w1_ref, b1_ref, w2_ref, b2_ref, o_ref):
    # x_ref:  (TM, Dp) bf16    w1_ref: (Dp, Hp) bf16   b1_ref: (1, Hp) f32
    # w2_ref: (Hp, Dp) bf16    b2_ref: (1, Dp)  f32    o_ref:  (TM, Dp) f32
    x = x_ref[...]
    # Encoder: relu(x @ W1 + b1) — bf16 MXU matmul, f32 accumulation/elementwise
    h = jnp.dot(x, w1_ref[...], preferred_element_type=jnp.float32) + b1_ref[...]
    h = jnp.maximum(h, 0.0)
    # Decoder: sigmoid(h @ W2 + b2) — bf16 MXU matmul, f32 accum + f32 sigmoid
    y = jnp.dot(h.astype(jnp.bfloat16), w2_ref[...],
                preferred_element_type=jnp.float32) + b2_ref[...]
    o_ref[...] = jax.nn.sigmoid(y)


def autoencoder_forward(x, w1, b1, w2, b2, image_shape, *, tile_m=256):
    """x: (B, H, W) float32. Weights stored (in_features, out_features).
    Returns (B, H, W) float32."""
    B = x.shape[0]
    D = int(np.prod(image_shape))
    H = w1.shape[1]

    # Lane-dense padded feature / hidden dims (multiples of 128).
    Dp = _round_up(D, 128)          # 784 -> 896
    Hp = _round_up(H, 128)          # 32  -> 128

    # Batch tile: multiple of 16 (bf16 sublane packing); pad batch to a
    # whole number of tiles so every block is full.
    TM = min(tile_m, _round_up(B, 16))
    Bp = _round_up(B, TM)
    num_tiles = Bp // TM

    x_flat = x.reshape(B, D)
    x_p = jnp.zeros((Bp, Dp), jnp.bfloat16).at[:B, :D].set(
        x_flat.astype(jnp.bfloat16))
    w1_p = jnp.zeros((Dp, Hp), jnp.bfloat16).at[:D, :H].set(
        w1.astype(jnp.bfloat16))
    b1_p = jnp.zeros((1, Hp), jnp.float32).at[:, :H].set(b1.reshape(1, H))
    w2_p = jnp.zeros((Hp, Dp), jnp.bfloat16).at[:H, :D].set(
        w2.astype(jnp.bfloat16))
    b2_p = jnp.zeros((1, Dp), jnp.float32).at[:, :D].set(b2.reshape(1, D))

    cost = pl.CostEstimate(
        flops=2 * 2 * Bp * Dp * Hp,                      # two matmuls
        transcendentals=Bp * Dp,                         # sigmoid
        bytes_accessed=(x_p.size * 2 + w1_p.size * 2 + w2_p.size * 2
                        + b1_p.size * 4 + b2_p.size * 4 + Bp * Dp * 4),
    )

    out_p = pl.pallas_call(
        autoencoder_kernel,
        out_shape=jax.ShapeDtypeStruct((Bp, Dp), jnp.float32),
        grid=(num_tiles,),
        in_specs=[
            pl.BlockSpec((TM, Dp), lambda i: (i, 0)),    # x: tiled over batch
            pl.BlockSpec((Dp, Hp), lambda i: (0, 0)),    # W1: VMEM-resident
            pl.BlockSpec((1, Hp), lambda i: (0, 0)),     # b1: VMEM-resident
            pl.BlockSpec((Hp, Dp), lambda i: (0, 0)),    # W2: VMEM-resident
            pl.BlockSpec((1, Dp), lambda i: (0, 0)),     # b2: VMEM-resident
        ],
        out_specs=pl.BlockSpec((TM, Dp), lambda i: (i, 0)),
        compiler_params=pltpu.CompilerParams(
            dimension_semantics=("parallel",),
        ),
        cost_estimate=cost,
    )(x_p, w1_p, b1_p, w2_p, b2_p)

    # Strip batch / feature padding and restore the image shape.
    return out_p[:B, :D].reshape((B,) + tuple(image_shape))


def init_params(key, image_shape=(28, 28), hidden_dim=32):
    """Deterministic PyTorch-style (uniform +/- 1/sqrt(fan_in)) init."""
    D = int(np.prod(image_shape))
    k1, k2, k3, k4 = jax.random.split(key, 4)
    bound1 = 1.0 / np.sqrt(D)
    bound2 = 1.0 / np.sqrt(hidden_dim)
    # stored as (in_features, out_features) so the kernel does x @ W
    w1 = jax.random.uniform(k1, (D, hidden_dim), jnp.float32, -bound1, bound1)
    b1 = jax.random.uniform(k2, (hidden_dim,), jnp.float32, -bound1, bound1)
    w2 = jax.random.uniform(k3, (hidden_dim, D), jnp.float32, -bound2, bound2)
    b2 = jax.random.uniform(k4, (D,), jnp.float32, -bound2, bound2)
    return w1, b1, w2, b2


if __name__ == "__main__":
    image_shape = (28, 28)
    hidden_dim = 32
    batch = 2

    key = jax.random.PRNGKey(0)
    pkey, xkey = jax.random.split(key)
    w1, b1, w2, b2 = init_params(pkey, image_shape, hidden_dim)
    x = jax.random.uniform(xkey, (batch,) + image_shape, jnp.float32)

    out = autoencoder_forward(x, w1, b1, w2, b2, image_shape)
    out = jax.block_until_ready(out)

    # sanity check against a pure-f32 JAX reference of the same math
    # (tolerance loosened for the bf16 matmul inputs; accumulation is f32)
    x_flat = x.reshape(batch, -1)
    h_ref = jnp.maximum(x_flat @ w1 + b1, 0.0)
    y_ref = jax.nn.sigmoid(h_ref @ w2 + b2).reshape((batch,) + image_shape)
    assert out.shape == (batch,) + image_shape
    np.testing.assert_allclose(np.asarray(out), np.asarray(y_ref),
                               rtol=2e-2, atol=2e-2)

    print("KERNEL_OK")
</pallas_src>

<mosaic_0001>
module attributes {stable_mosaic.version = 11 : i64} {
  func.func @autoencoder_kernel(%arg0: i32, %arg1: memref<16x896xbf16, #tpu.memory_space<vmem>>, %arg2: memref<896x128xbf16, #tpu.memory_space<vmem>>, %arg3: memref<1x128xf32, #tpu.memory_space<vmem>>, %arg4: memref<128x896xbf16, #tpu.memory_space<vmem>>, %arg5: memref<1x896xf32, #tpu.memory_space<vmem>>, %arg6: memref<16x896xf32, #tpu.memory_space<vmem>>) attributes {dimension_semantics = [#tpu.dimension_semantics<parallel>], iteration_bounds = array<i64: 1>, scalar_prefetch = 0 : i64, scratch_operands = 0 : i64, tpu.core_type = #tpu.core_type<tc>, window_params = [{transform_indices = @transform_0, window_bounds = array<i64: 16, 896>}, {pipeline_mode = #tpu.pipeline_mode<synchronous>, transform_indices = @transform_1, window_bounds = array<i64: 896, 128>}, {pipeline_mode = #tpu.pipeline_mode<synchronous>, transform_indices = @transform_2, window_bounds = array<i64: 1, 128>}, {pipeline_mode = #tpu.pipeline_mode<synchronous>, transform_indices = @transform_3, window_bounds = array<i64: 128, 896>}, {pipeline_mode = #tpu.pipeline_mode<synchronous>, transform_indices = @transform_4, window_bounds = array<i64: 1, 896>}, {transform_indices = @transform_5, window_bounds = array<i64: 16, 896>}]} {
    %c0 = arith.constant 0 : index
    %c0_0 = arith.constant 0 : index
    %0 = vector.load %arg1[%c0, %c0_0] : memref<16x896xbf16, #tpu.memory_space<vmem>>, vector<16x896xbf16>
    %c0_1 = arith.constant 0 : index
    %c0_2 = arith.constant 0 : index
    %1 = vector.load %arg2[%c0_1, %c0_2] : memref<896x128xbf16, #tpu.memory_space<vmem>>, vector<896x128xbf16>
    %cst = arith.constant dense<0.000000e+00> : vector<16x128xf32>
    %2 = tpu.matmul %0, %1, %cst {dimension_numbers = #tpu.dot_dimension_numbers<[1], [0], [0], [1], [0, 0, 1, 1], [], []>} : vector<16x896xbf16>, vector<896x128xbf16>, vector<16x128xf32> -> vector<16x128xf32>
    %c0_3 = arith.constant 0 : index
    %c0_4 = arith.constant 0 : index
    %3 = vector.load %arg3[%c0_3, %c0_4] : memref<1x128xf32, #tpu.memory_space<vmem>>, vector<1x128xf32>
    %4 = vector.broadcast %3 : vector<1x128xf32> to vector<16x128xf32>
    %5 = arith.addf %2, %4 : vector<16x128xf32>
    %cst_5 = arith.constant 0.000000e+00 : f32
    %6 = vector.broadcast %cst_5 : f32 to vector<16x128xf32>
    %7 = arith.maximumf %5, %6 : vector<16x128xf32>
    %8 = arith.truncf %7 : vector<16x128xf32> to vector<16x128xbf16>
    %c0_6 = arith.constant 0 : index
    %c0_7 = arith.constant 0 : index
    %9 = vector.load %arg4[%c0_6, %c0_7] : memref<128x896xbf16, #tpu.memory_space<vmem>>, vector<128x896xbf16>
    %cst_8 = arith.constant dense<0.000000e+00> : vector<16x896xf32>
    %10 = tpu.matmul %8, %9, %cst_8 {dimension_numbers = #tpu.dot_dimension_numbers<[1], [0], [0], [1], [0, 0, 1, 1], [], []>} : vector<16x128xbf16>, vector<128x896xbf16>, vector<16x896xf32> -> vector<16x896xf32>
    %c0_9 = arith.constant 0 : index
    %c0_10 = arith.constant 0 : index
    %11 = vector.load %arg5[%c0_9, %c0_10] : memref<1x896xf32, #tpu.memory_space<vmem>>, vector<1x896xf32>
    %12 = vector.broadcast %11 : vector<1x896xf32> to vector<16x896xf32>
    %13 = arith.addf %10, %12 : vector<16x896xf32>
    %14 = arith.negf %13 : vector<16x896xf32>
    %15 = math.exp %14 : vector<16x896xf32>
    %cst_11 = arith.constant 1.000000e+00 : f32
    %16 = vector.broadcast %cst_11 : f32 to vector<16x896xf32>
    %17 = arith.addf %16, %15 : vector<16x896xf32>
    %18 = arith.divf %16, %17 : vector<16x896xf32>
    %c0_12 = arith.constant 0 : index
    %c0_13 = arith.constant 0 : index
    %19 = vector.load %arg6[%c0_12, %c0_13] : memref<16x896xf32, #tpu.memory_space<vmem>>, vector<16x896xf32>
    tpu.vector_store %arg6[%c0_12, %c0_13], %18 {strides = array<i32>} : memref<16x896xf32, #tpu.memory_space<vmem>>, vector<16x896xf32>,
    return
  }
  func.func @transform_0(%arg0: i32) -> (i32, i32) {
    %c0_i32 = arith.constant 0 : i32
    %c0_i32_0 = arith.constant 0 : i32
    return %arg0, %c0_i32 : i32, i32
  }
  func.func @transform_1(%arg0: i32) -> (i32, i32) {
    %c0_i32 = arith.constant 0 : i32
    %c0_i32_0 = arith.constant 0 : i32
    %c0_i32_1 = arith.constant 0 : i32
    return %c0_i32, %c0_i32_0 : i32, i32
  }
  func.func @transform_2(%arg0: i32) -> (i32, i32) {
    %c0_i32 = arith.constant 0 : i32
    %c0_i32_0 = arith.constant 0 : i32
    %c0_i32_1 = arith.constant 0 : i32
    return %c0_i32, %c0_i32_0 : i32, i32
  }
  func.func @transform_3(%arg0: i32) -> (i32, i32) {
    %c0_i32 = arith.constant 0 : i32
    %c0_i32_0 = arith.constant 0 : i32
    %c0_i32_1 = arith.constant 0 : i32
    return %c0_i32, %c0_i32_0 : i32, i32
  }
  func.func @transform_4(%arg0: i32) -> (i32, i32) {
    %c0_i32 = arith.constant 0 : i32
    %c0_i32_0 = arith.constant 0 : i32
    %c0_i32_1 = arith.constant 0 : i32
    return %c0_i32, %c0_i32_0 : i32, i32
  }
  func.func @transform_5(%arg0: i32) -> (i32, i32) {
    %c0_i32 = arith.constant 0 : i32
    %c0_i32_0 = arith.constant 0 : i32
    return %arg0, %c0_i32 : i32, i32
  }
}

</mosaic_0001>

<llo_original>
// kernel: tpu_custom_call.1
$region0: #{tpu_custom_call.1}
  #allocation0 [shape = 'u32[]', space=smem, size = 0x4, offset = 0x4, fixed_abs, tag = 'smem constant byte address 0x4 - core index']
  #allocation1 [shape = 'u32[72,128]{1,0:T(1,128)}', space=vmem, size = 0x9000, scoped, tag = 'internal scratch']
  %s0 = inlined_call_operand.hbm [shape: bf16[16,896], index: 0, kind: input, shape index: {}]
  %s1 = inlined_call_operand.hbm [shape: bf16[896,128], index: 1, kind: input, shape index: {}]
  %s2 = inlined_call_operand.vmem [shape: f32[1,128], index: 2, kind: input, shape index: {}]
  %s3 = inlined_call_operand.hbm [shape: bf16[128,896], index: 3, kind: input, shape index: {}]
  %s4 = inlined_call_operand.hbm [shape: f32[1,896], index: 4, kind: input, shape index: {}]
  %s5 = inlined_call_operand.hbm [shape: f32[16,896], index: 5, kind: output, shape index: {}]
  %s6 = sld [smem:[#allocation0]]
  $region46: #{tpu_custom_call.1} parent=0
    _
  %s8 = ssub.s32 1, %s6
  %s9 = scalar_select 0, %s8, %s6
  $region1: #{tpu_custom_call.1} parent=0
    #allocation2 [shape = 'u8[28672]{0}', space=vmem, size = 0x7000, scoped, tag = 'input window, operand 0, single buffered']
    #allocation3 [shape = 's32[1]{0}', space=sflag, size = 0x4, scoped, tag = 'scoped memory for tpu_custom_call.1']
    #allocation4 [shape = 's32[1]{0}', space=sflag, size = 0x4, scoped, tag = 'scoped memory for tpu_custom_call.1']
    #allocation5 [shape = 'u8[229376]{0}', space=vmem, size = 0x38000, scoped, tag = 'input window, operand 1, single buffered']
    #allocation6 [shape = 's32[1]{0}', space=sflag, size = 0x4, scoped, tag = 'scoped memory for tpu_custom_call.1']
    #allocation7 [shape = 'u8[229376]{0}', space=vmem, size = 0x38000, scoped, tag = 'input window, operand 3, single buffered']
    #allocation8 [shape = 'u8[3584]{0}', space=vmem, size = 0x1000, scoped, tag = 'input window, operand 4, single buffered']
    #allocation9 [shape = 's32[1]{0}', space=sflag, size = 0x4, scoped, tag = 'scoped memory for tpu_custom_call.1']
    #allocation10 [shape = 'u8[57344]{0}', space=vmem, size = 0xe000, scoped, tag = 'output window, operand 0, single buffered']
    %10 = vsyncpa [#allocation3], 0
    %11 = vsyncpa [#allocation6], 0
    %12 = vsyncpa [#allocation9], 0
    %13 = vsyncpa [#allocation4], 0
    // Predicated region
    $region2: #{tpu_custom_call.1} parent=1 // pred_check
      _
    $region3: #{tpu_custom_call.1} parent=1 // pred_check_branch
      %15 = sbr.rel (0) target = $region5
    $region4: #{tpu_custom_call.1} parent=1 // pred_region
      %17 = vsyncadd [#allocation3], 0
      %s18 = sshll.u32 %s0, 4
      %s19 = int_to_ptr.hbm [resolvable:$true] %s18
      %s20 = sshll.u32 [#allocation2], 4
      %s21 = int_to_ptr.vmem [resolvable:$true] %s20
      %26 = dma.hbm_to_vmem [thread:$0]  %s19, 896, %s21, [#allocation3], 448, 448, 28
    $region5: #{tpu_custom_call.1} parent=1 // pred_fallthru
      _
    // Predicated region
    $region6: #{tpu_custom_call.1} parent=1 // pred_check
      _
    $region7: #{tpu_custom_call.1} parent=1 // pred_check_branch
      %28 = sbr.rel (0) target = $region9
    $region8: #{tpu_custom_call.1} parent=1 // pred_region
      %30 = vsyncadd [#allocation6], 0
      %s31 = sshll.u32 %s1, 4
      %s32 = int_to_ptr.hbm [resolvable:$true] %s31
      %s33 = sshll.u32 [#allocation5], 4
      %s34 = int_to_ptr.vmem [resolvable:$true] %s33
      %39 = dma.hbm_to_vmem [thread:$0]  %s32, 7168, %s34, [#allocation6], 64, 64, 4
    $region9: #{tpu_custom_call.1} parent=1 // pred_fallthru
      _
    // Predicated region
    $region10: #{tpu_custom_call.1} parent=1 // pred_check
      _
    $region11: #{tpu_custom_call.1} parent=1 // pred_check_branch
      %41 = sbr.rel (0) target = $region13
    $region12: #{tpu_custom_call.1} parent=1 // pred_region
      _
    $region13: #{tpu_custom_call.1} parent=1 // pred_fallthru
      _
    // Predicated region
    $region14: #{tpu_custom_call.1} parent=1 // pred_check
      _
    $region15: #{tpu_custom_call.1} parent=1 // pred_check_branch
      %43 = sbr.rel (0) target = $region17
    $region16: #{tpu_custom_call.1} parent=1 // pred_region
      %45 = vsyncadd [#allocation6], 0
      %s46 = sshll.u32 %s3, 4
      %s47 = int_to_ptr.hbm [resolvable:$true] %s46
      %s48 = sshll.u32 [#allocation7], 4
      %s49 = int_to_ptr.vmem [resolvable:$true] %s48
      %54 = dma.hbm_to_vmem [thread:$0]  %s47, 7168, %s49, [#allocation6], 448, 448, 28
    $region17: #{tpu_custom_call.1} parent=1 // pred_fallthru
      _
    // Predicated region
    $region18: #{tpu_custom_call.1} parent=1 // pred_check
      _
    $region19: #{tpu_custom_call.1} parent=1 // pred_check_branch
      %56 = sbr.rel (0) target = $region21
    $region20: #{tpu_custom_call.1} parent=1 // pred_region
      %58 = vsyncadd [#allocation9], 0
      %s60 = sshll.u32 %s4, 4
      %s61 = int_to_ptr.hbm [resolvable:$true] %s60
      %s62 = sshll.u32 [#allocation8], 4
      %s63 = int_to_ptr.vmem [resolvable:$true] %s62
      %65 = dma.hbm_to_vmem [thread:$0]  %s61, 112, %s63, [#allocation9]
    $region21: #{tpu_custom_call.1} parent=1 // pred_fallthru
      _
    // Predicated region
    $region22: #{tpu_custom_call.1} parent=1 // pred_check
      _
    $region23: #{tpu_custom_call.1} parent=1 // pred_check_branch
      %67 = sbr.rel (0) target = $region25
    $region24: #{tpu_custom_call.1} parent=1 // pred_region
      %69 = dma.done [#allocation3], 896
    $region25: #{tpu_custom_call.1} parent=1 // pred_fallthru
      _
    // Predicated region
    $region26: #{tpu_custom_call.1} parent=1 // pred_check
      _
    $region27: #{tpu_custom_call.1} parent=1 // pred_check_branch
      %71 = sbr.rel (0) target = $region29
    $region28: #{tpu_custom_call.1} parent=1 // pred_region
      %73 = dma.done [#allocation6], 7168
    $region29: #{tpu_custom_call.1} parent=1 // pred_fallthru
      _
    // Predicated region
    $region30: #{tpu_custom_call.1} parent=1 // pred_check
      _
    $region31: #{tpu_custom_call.1} parent=1 // pred_check_branch
      %75 = sbr.rel (0) target = $region33
    $region32: #{tpu_custom_call.1} parent=1 // pred_region
      %77 = dma.done [#allocation6], 7168
    $region33: #{tpu_custom_call.1} parent=1 // pred_fallthru
      _
    // Predicated region
    $region34: #{tpu_custom_call.1} parent=1 // pred_check
      _
    $region35: #{tpu_custom_call.1} parent=1 // pred_check_branch
      %79 = sbr.rel (0) target = $region37
    $region36: #{tpu_custom_call.1} parent=1 // pred_region
      %81 = dma.done [#allocation9], 112
    $region37: #{tpu_custom_call.1} parent=1 // pred_fallthru
      _
    %v82 = vld [vmem:[#allocation2] sm:$0xff]
    %v83 = vld [vmem:[#allocation2 + $0x8] sm:$0xff]
    %v84 = vld [vmem:[#allocation2 + $0x10] sm:$0xff]
    %v85 = vld [vmem:[#allocation2 + $0x18] sm:$0xf]
    %v86 = vld [vmem:[#allocation2 + $0x1c] sm:$0xff]
    %v87 = vld [vmem:[#allocation2 + $0x24] sm:$0xff]
    %v88 = vld [vmem:[#allocation2 + $0x2c] sm:$0xff]
    %v89 = vld [vmem:[#allocation2 + $0x34] sm:$0xf]
    %v90 = vld [vmem:[#allocation5] sm:$0xf]
    %v91 = vld [vmem:[#allocation5 + $0x4] sm:$0xf]
    %v92 = vld [vmem:[#allocation5 + $0x8] sm:$0xf]
    %v93 = vld [vmem:[#allocation5 + $0xc] sm:$0xf]
    %v94 = vld [vmem:[#allocation5 + $0x10] sm:$0xf]
    %v95 = vld [vmem:[#allocation5 + $0x14] sm:$0xf]
    %v96 = vld [vmem:[#allocation5 + $0x18] sm:$0xf]
    %v97 = vld [vmem:[#allocation5 + $0x1c] sm:$0xf]
    %v98 = vld [vmem:[#allocation5 + $0x20] sm:$0xf]
    %v99 = vld [vmem:[#allocation5 + $0x24] sm:$0xf]
    %v100 = vld [vmem:[#allocation5 + $0x28] sm:$0xf]
    %v101 = vld [vmem:[#allocation5 + $0x2c] sm:$0xf]
    %v102 = vld [vmem:[#allocation5 + $0x30] sm:$0xf]
    %v103 = vld [vmem:[#allocation5 + $0x34] sm:$0xf]
    %v104 = vld [vmem:[#allocation5 + $0x38] sm:$0xf]
    %v105 = vld [vmem:[#allocation5 + $0x3c] sm:$0xf]
    %v106 = vld [vmem:[#allocation5 + $0x40] sm:$0xf]
    %v107 = vld [vmem:[#allocation5 + $0x44] sm:$0xf]
    %v108 = vld [vmem:[#allocation5 + $0x48] sm:$0xf]
    %v109 = vld [vmem:[#allocation5 + $0x4c] sm:$0xf]
    %v110 = vld [vmem:[#allocation5 + $0x50] sm:$0xf]
    %v111 = vld [vmem:[#allocation5 + $0x54] sm:$0xf]
    %v112 = vld [vmem:[#allocation5 + $0x58] sm:$0xf]
    %v113 = vld [vmem:[#allocation5 + $0x5c] sm:$0xf]
    %v114 = vld [vmem:[#allocation5 + $0x60] sm:$0xf]
    %v115 = vld [vmem:[#allocation5 + $0x64] sm:$0xf]
    %v116 = vld [vmem:[#allocation5 + $0x68] sm:$0xf]
    %v117 = vld [vmem:[#allocation5 + $0x6c] sm:$0xf]
    %v118 = vld [vmem:[#allocation5 + $0x70] sm:$0xf]
    %v119 = vld [vmem:[#allocation5 + $0x74] sm:$0xf]
    %v120 = vld [vmem:[#allocation5 + $0x78] sm:$0xf]
    %v121 = vld [vmem:[#allocation5 + $0x7c] sm:$0xf]
    %v122 = vld [vmem:[#allocation5 + $0x80] sm:$0xf]
    %v123 = vld [vmem:[#allocation5 + $0x84] sm:$0xf]
    %v124 = vld [vmem:[#allocation5 + $0x88] sm:$0xf]
    %v125 = vld [vmem:[#allocation5 + $0x8c] sm:$0xf]
    %v126 = vld [vmem:[#allocation5 + $0x90] sm:$0xf]
    %v127 = vld [vmem:[#allocation5 + $0x94] sm:$0xf]
    %v128 = vld [vmem:[#allocation5 + $0x98] sm:$0xf]
    %v129 = vld [vmem:[#allocation5 + $0x9c] sm:$0xf]
    %v130 = vld [vmem:[#allocation5 + $0xa0] sm:$0xf]
    %v131 = vld [vmem:[#allocation5 + $0xa4] sm:$0xf]
    %v132 = vld [vmem:[#allocation5 + $0xa8] sm:$0xf]
    %v133 = vld [vmem:[#allocation5 + $0xac] sm:$0xf]
    %v134 = vld [vmem:[#allocation5 + $0xb0] sm:$0xf]
    %v135 = vld [vmem:[#allocation5 + $0xb4] sm:$0xf]
    %v136 = vld [vmem:[#allocation5 + $0xb8] sm:$0xf]
    %v137 = vld [vmem:[#allocation5 + $0xbc] sm:$0xf]
    %v138 = vld [vmem:[#allocation5 + $0xc0] sm:$0xf]
    %v139 = vld [vmem:[#allocation5 + $0xc4] sm:$0xf]
    %v140 = vld [vmem:[#allocation5 + $0xc8] sm:$0xf]
    %v141 = vld [vmem:[#allocation5 + $0xcc] sm:$0xf]
    %v142 = vld [vmem:[#allocation5 + $0xd0] sm:$0xf]
    %v143 = vld [vmem:[#allocation5 + $0xd4] sm:$0xf]
    %v144 = vld [vmem:[#allocation5 + $0xd8] sm:$0xf]
    %v145 = vld [vmem:[#allocation5 + $0xdc] sm:$0xf]
    %v146 = vld [vmem:[#allocation5 + $0xe0] sm:$0xf]
    %v147 = vld [vmem:[#allocation5 + $0xe4] sm:$0xf]
    %v148 = vld [vmem:[#allocation5 + $0xe8] sm:$0xf]
    %v149 = vld [vmem:[#allocation5 + $0xec] sm:$0xf]
    %v150 = vld [vmem:[#allocation5 + $0xf0] sm:$0xf]
    %v151 = vld [vmem:[#allocation5 + $0xf4] sm:$0xf]
    %v152 = vld [vmem:[#allocation5 + $0xf8] sm:$0xf]
    %v153 = vld [vmem:[#allocation5 + $0xfc] sm:$0xf]
    %v154 = vld [vmem:[#allocation5 + $0x100] sm:$0xf]
    %v155 = vld [vmem:[#allocation5 + $0x104] sm:$0xf]
    %v156 = vld [vmem:[#allocation5 + $0x108] sm:$0xf]
    %v157 = vld [vmem:[#allocation5 + $0x10c] sm:$0xf]
    %v158 = vld [vmem:[#allocation5 + $0x110] sm:$0xf]
    %v159 = vld [vmem:[#allocation5 + $0x114] sm:$0xf]
    %v160 = vld [vmem:[#allocation5 + $0x118] sm:$0xf]
    %v161 = vld [vmem:[#allocation5 + $0x11c] sm:$0xf]
    %v162 = vld [vmem:[#allocation5 + $0x120] sm:$0xf]
    %v163 = vld [vmem:[#allocation5 + $0x124] sm:$0xf]
    %v164 = vld [vmem:[#allocation5 + $0x128] sm:$0xf]
    %v165 = vld [vmem:[#allocation5 + $0x12c] sm:$0xf]
    %v166 = vld [vmem:[#allocation5 + $0x130] sm:$0xf]
    %v167 = vld [vmem:[#allocation5 + $0x134] sm:$0xf]
    %v168 = vld [vmem:[#allocation5 + $0x138] sm:$0xf]
    %v169 = vld [vmem:[#allocation5 + $0x13c] sm:$0xf]
    %v170 = vld [vmem:[#allocation5 + $0x140] sm:$0xf]
    %v171 = vld [vmem:[#allocation5 + $0x144] sm:$0xf]
    %v172 = vld [vmem:[#allocation5 + $0x148] sm:$0xf]
    %v173 = vld [vmem:[#allocation5 + $0x14c] sm:$0xf]
    %v174 = vld [vmem:[#allocation5 + $0x150] sm:$0xf]
    %v175 = vld [vmem:[#allocation5 + $0x154] sm:$0xf]
    %v176 = vld [vmem:[#allocation5 + $0x158] sm:$0xf]
    %v177 = vld [vmem:[#allocation5 + $0x15c] sm:$0xf]
    %v178 = vld [vmem:[#allocation5 + $0x160] sm:$0xf]
    %v179 = vld [vmem:[#allocation5 + $0x164] sm:$0xf]
    %v180 = vld [vmem:[#allocation5 + $0x168] sm:$0xf]
    %v181 = vld [vmem:[#allocation5 + $0x16c] sm:$0xf]
    %v182 = vld [vmem:[#allocation5 + $0x170] sm:$0xf]
    %v183 = vld [vmem:[#allocation5 + $0x174] sm:$0xf]
    %v184 = vld [vmem:[#allocation5 + $0x178] sm:$0xf]
    %v185 = vld [vmem:[#allocation5 + $0x17c] sm:$0xf]
    %v186 = vld [vmem:[#allocation5 + $0x180] sm:$0xf]
    %v187 = vld [vmem:[#allocation5 + $0x184] sm:$0xf]
    %v188 = vld [vmem:[#allocation5 + $0x188] sm:$0xf]
    %v189 = vld [vmem:[#allocation5 + $0x18c] sm:$0xf]
    %v190 = vld [vmem:[#allocation5 + $0x190] sm:$0xf]
    %v191 = vld [vmem:[#allocation5 + $0x194] sm:$0xf]
    %v192 = vld [vmem:[#allocation5 + $0x198] sm:$0xf]
    %v193 = vld [vmem:[#allocation5 + $0x19c] sm:$0xf]
    %v194 = vld [vmem:[#allocation5 + $0x1a0] sm:$0xf]
    %v195 = vld [vmem:[#allocation5 + $0x1a4] sm:$0xf]
    %v196 = vld [vmem:[#allocation5 + $0x1a8] sm:$0xf]
    %v197 = vld [vmem:[#allocation5 + $0x1ac] sm:$0xf]
    %v198 = vld [vmem:[#allocation5 + $0x1b0] sm:$0xf]
    %v199 = vld [vmem:[#allocation5 + $0x1b4] sm:$0xf]
    %v200 = vld [vmem:[#allocation5 + $0x1b8] sm:$0xf]
    %v201 = vld [vmem:[#allocation5 + $0x1bc] sm:$0xf]
    %v202 = vld [vmem:[%s2] sm:$0x1]
    %v204 = vperm.slane %v202, 0
    %v214 = vunpack.c.l.b16 %v82
    %v215 = vunpack.c.h.b16 %v82
    %v216 = vunpack.c.l.b16 %v83
    %v217 = vunpack.c.h.b16 %v83
    %v218 = vunpack.c.l.b16 %v84
    %v219 = vunpack.c.h.b16 %v84
    %v220 = vunpack.c.l.b16 %v85
    %v221 = vunpack.c.l.b16 %v86
    %v222 = vunpack.c.h.b16 %v86
    %v223 = vunpack.c.l.b16 %v87
    %v224 = vunpack.c.h.b16 %v87
    %v225 = vunpack.c.l.b16 %v88
    %v226 = vunpack.c.h.b16 %v88
    %v227 = vunpack.c.l.b16 %v89
    %v228 = vpack.c.b16 %v221, %v214
    %v229 = vpack.c.b16 %v222, %v215
    %v230 = vpack.c.b16 %v223, %v216
    %v231 = vpack.c.b16 %v224, %v217
    %v232 = vpack.c.b16 %v225, %v218
    %v233 = vpack.c.b16 %v226, %v219
    %v234 = vpack.c.b16 %v227, %v220
    %v354 = vunpack.c.l.b16 %v90
    %v355 = vunpack.c.l.b16 %v91
    %v356 = vunpack.c.l.b16 %v92
    %v357 = vunpack.c.l.b16 %v93
    %v358 = vunpack.c.l.b16 %v94
    %v359 = vunpack.c.l.b16 %v95
    %v360 = vunpack.c.l.b16 %v96
    %v361 = vunpack.c.l.b16 %v97
    %v362 = vunpack.c.l.b16 %v98
    %v363 = vunpack.c.l.b16 %v99
    %v364 = vunpack.c.l.b16 %v100
    %v365 = vunpack.c.l.b16 %v101
    %v366 = vunpack.c.l.b16 %v102
    %v367 = vunpack.c.l.b16 %v103
    %v368 = vunpack.c.l.b16 %v104
    %v369 = vunpack.c.l.b16 %v105
    %v370 = vunpack.c.l.b16 %v106
    %v371 = vunpack.c.l.b16 %v107
    %v372 = vunpack.c.l.b16 %v108
    %v373 = vunpack.c.l.b16 %v109
    %v374 = vunpack.c.l.b16 %v110
    %v375 = vunpack.c.l.b16 %v111
    %v376 = vunpack.c.l.b16 %v112
    %v377 = vunpack.c.l.b16 %v113
    %v378 = vunpack.c.l.b16 %v114
    %v379 = vunpack.c.l.b16 %v115
    %v380 = vunpack.c.l.b16 %v116
    %v381 = vunpack.c.l.b16 %v117
    %v382 = vunpack.c.l.b16 %v118
    %v383 = vunpack.c.l.b16 %v119
    %v384 = vunpack.c.l.b16 %v120
    %v385 = vunpack.c.l.b16 %v121
    %v386 = vunpack.c.l.b16 %v122
    %v387 = vunpack.c.l.b16 %v123
    %v388 = vunpack.c.l.b16 %v124
    %v389 = vunpack.c.l.b16 %v125
    %v390 = vunpack.c.l.b16 %v126
    %v391 = vunpack.c.l.b16 %v127
    %v392 = vunpack.c.l.b16 %v128
    %v393 = vunpack.c.l.b16 %v129
    %v394 = vunpack.c.l.b16 %v130
    %v395 = vunpack.c.l.b16 %v131
    %v396 = vunpack.c.l.b16 %v132
    %v397 = vunpack.c.l.b16 %v133
    %v398 = vunpack.c.l.b16 %v134
    %v399 = vunpack.c.l.b16 %v135
    %v400 = vunpack.c.l.b16 %v136
    %v401 = vunpack.c.l.b16 %v137
    %v402 = vunpack.c.l.b16 %v138
    %v403 = vunpack.c.l.b16 %v139
    %v404 = vunpack.c.l.b16 %v140
    %v405 = vunpack.c.l.b16 %v141
    %v406 = vunpack.c.l.b16 %v142
    %v407 = vunpack.c.l.b16 %v143
    %v408 = vunpack.c.l.b16 %v144
    %v409 = vunpack.c.l.b16 %v145
    %v410 = vunpack.c.l.b16 %v146
    %v411 = vunpack.c.l.b16 %v147
    %v412 = vunpack.c.l.b16 %v148
    %v413 = vunpack.c.l.b16 %v149
    %v414 = vunpack.c.l.b16 %v150
    %v415 = vunpack.c.l.b16 %v151
    %v416 = vunpack.c.l.b16 %v152
    %v417 = vunpack.c.l.b16 %v153
    %v418 = vunpack.c.l.b16 %v154
    %v419 = vunpack.c.l.b16 %v155
    %v420 = vunpack.c.l.b16 %v156
    %v421 = vunpack.c.l.b16 %v157
    %v422 = vunpack.c.l.b16 %v158
    %v423 = vunpack.c.l.b16 %v159
    %v424 = vunpack.c.l.b16 %v160
    %v425 = vunpack.c.l.b16 %v161
    %v426 = vunpack.c.l.b16 %v162
    %v427 = vunpack.c.l.b16 %v163
    %v428 = vunpack.c.l.b16 %v164
    %v429 = vunpack.c.l.b16 %v165
    %v430 = vunpack.c.l.b16 %v166
    %v431 = vunpack.c.l.b16 %v167
    %v432 = vunpack.c.l.b16 %v168
    %v433 = vunpack.c.l.b16 %v169
    %v434 = vunpack.c.l.b16 %v170
    %v435 = vunpack.c.l.b16 %v171
    %v436 = vunpack.c.l.b16 %v172
    %v437 = vunpack.c.l.b16 %v173
    %v438 = vunpack.c.l.b16 %v174
    %v439 = vunpack.c.l.b16 %v175
    %v440 = vunpack.c.l.b16 %v176
    %v441 = vunpack.c.l.b16 %v177
    %v442 = vunpack.c.l.b16 %v178
    %v443 = vunpack.c.l.b16 %v179
    %v444 = vunpack.c.l.b16 %v180
    %v445 = vunpack.c.l.b16 %v181
    %v446 = vunpack.c.l.b16 %v182
    %v447 = vunpack.c.l.b16 %v183
    %v448 = vunpack.c.l.b16 %v184
    %v449 = vunpack.c.l.b16 %v185
    %v450 = vunpack.c.l.b16 %v186
    %v451 = vunpack.c.l.b16 %v187
    %v452 = vunpack.c.l.b16 %v188
    %v453 = vunpack.c.l.b16 %v189
    %v454 = vunpack.c.l.b16 %v190
    %v455 = vunpack.c.l.b16 %v191
    %v456 = vunpack.c.l.b16 %v192
    %v457 = vunpack.c.l.b16 %v193
    %v458 = vunpack.c.l.b16 %v194
    %v459 = vunpack.c.l.b16 %v195
    %v460 = vunpack.c.l.b16 %v196
    %v461 = vunpack.c.l.b16 %v197
    %v462 = vunpack.c.l.b16 %v198
    %v463 = vunpack.c.l.b16 %v199
    %v464 = vunpack.c.l.b16 %v200
    %v465 = vunpack.c.l.b16 %v201
    %v466 = vpack.c.b16 %v355, %v354
    %v467 = vpack.c.b16 %v357, %v356
    %v468 = vpack.c.b16 %v359, %v358
    %v469 = vpack.c.b16 %v361, %v360
    %v470 = vpack.c.b16 %v363, %v362
    %v471 = vpack.c.b16 %v365, %v364
    %v472 = vpack.c.b16 %v367, %v366
    %v473 = vpack.c.b16 %v369, %v368
    %v474 = vpack.c.b16 %v371, %v370
    %v475 = vpack.c.b16 %v373, %v372
    %v476 = vpack.c.b16 %v375, %v374
    %v477 = vpack.c.b16 %v377, %v376
    %v478 = vpack.c.b16 %v379, %v378
    %v479 = vpack.c.b16 %v381, %v380
    %v480 = vpack.c.b16 %v383, %v382
    %v481 = vpack.c.b16 %v385, %v384
    %v482 = vpack.c.b16 %v387, %v386
    %v483 = vpack.c.b16 %v389, %v388
    %v484 = vpack.c.b16 %v391, %v390
    %v485 = vpack.c.b16 %v393, %v392
    %v486 = vpack.c.b16 %v395, %v394
    %v487 = vpack.c.b16 %v397, %v396
    %v488 = vpack.c.b16 %v399, %v398
    %v489 = vpack.c.b16 %v401, %v400
    %v490 = vpack.c.b16 %v403, %v402
    %v491 = vpack.c.b16 %v405, %v404
    %v492 = vpack.c.b16 %v407, %v406
    %v493 = vpack.c.b16 %v409, %v408
    %v494 = vpack.c.b16 %v411, %v410
    %v495 = vpack.c.b16 %v413, %v412
    %v496 = vpack.c.b16 %v415, %v414
    %v497 = vpack.c.b16 %v417, %v416
    %v498 = vpack.c.b16 %v419, %v418
    %v499 = vpack.c.b16 %v421, %v420
    %v500 = vpack.c.b16 %v423, %v422
    %v501 = vpack.c.b16 %v425, %v424
    %v502 = vpack.c.b16 %v427, %v426
    %v503 = vpack.c.b16 %v429, %v428
    %v504 = vpack.c.b16 %v431, %v430
    %v505 = vpack.c.b16 %v433, %v432
    %v506 = vpack.c.b16 %v435, %v434
    %v507 = vpack.c.b16 %v437, %v436
    %v508 = vpack.c.b16 %v439, %v438
    %v509 = vpack.c.b16 %v441, %v440
    %v510 = vpack.c.b16 %v443, %v442
    %v511 = vpack.c.b16 %v445, %v444
    %v512 = vpack.c.b16 %v447, %v446
    %v513 = vpack.c.b16 %v449, %v448
    %v514 = vpack.c.b16 %v451, %v450
    %v515 = vpack.c.b16 %v453, %v452
    %v516 = vpack.c.b16 %v455, %v454
    %v517 = vpack.c.b16 %v457, %v456
    %v518 = vpack.c.b16 %v459, %v458
    %v519 = vpack.c.b16 %v461, %v460
    %v520 = vpack.c.b16 %v463, %v462
    %v521 = vpack.c.b16 %v465, %v464
    %578 = vmatpush.bf16.msra.mxu0 %v473
    %579 = vmatpush.bf16.msra.mxu0 %v472
    %580 = vmatpush.bf16.msra.mxu0 %v471
    %581 = vmatpush.bf16.msra.mxu0 %v470
    %582 = vmatpush.bf16.msra.mxu0 %v469
    %583 = vmatpush.bf16.msra.mxu0 %v468
    %584 = vmatpush.bf16.msra.mxu0 %v467
    %585 = vmatpush.bf16.msra.mxu0 %v466
    %586 = vmatmul.bf16.gmra.mxu0 %v228
    %v587 = vpop.f32.mrf.mxu0
    %v588 = vadd.f32 %v204, %v587
    %v589 = vpop.f32.mrf.mxu0
    %v590 = vadd.f32 %v204, %v589
    %591 = vdwg.mxu0
    %592 = vmatpush.bf16.msra.mxu0 %v481
    %593 = vmatpush.bf16.msra.mxu0 %v480
    %594 = vmatpush.bf16.msra.mxu0 %v479
    %595 = vmatpush.bf16.msra.mxu0 %v478
    %596 = vmatpush.bf16.msra.mxu0 %v477
    %597 = vmatpush.bf16.msra.mxu0 %v476
    %598 = vmatpush.bf16.msra.mxu0 %v475
    %599 = vmatpush.bf16.msra.mxu0 %v474
    %600 = vmatmul.bf16.gmra.mxu0 %v229
    %v601 = vpop.f32.mrf.mxu0
    %v602 = vadd.f32 %v588, %v601
    %v603 = vpop.f32.mrf.mxu0
    %v604 = vadd.f32 %v590, %v603
    %605 = vdwg.mxu0
    %606 = vmatpush.bf16.msra.mxu0 %v489
    %607 = vmatpush.bf16.msra.mxu0 %v488
    %608 = vmatpush.bf16.msra.mxu0 %v487
    %609 = vmatpush.bf16.msra.mxu0 %v486
    %610 = vmatpush.bf16.msra.mxu0 %v485
    %611 = vmatpush.bf16.msra.mxu0 %v484
    %612 = vmatpush.bf16.msra.mxu0 %v483
    %613 = vmatpush.bf16.msra.mxu0 %v482
    %614 = vmatmul.bf16.gmra.mxu0 %v230
    %v615 = vpop.f32.mrf.mxu0
    %v616 = vadd.f32 %v602, %v615
    %v617 = vpop.f32.mrf.mxu0
    %v618 = vadd.f32 %v604, %v617
    %619 = vdwg.mxu0
    %620 = vmatpush.bf16.msra.mxu0 %v497
    %621 = vmatpush.bf16.msra.mxu0 %v496
    %622 = vmatpush.bf16.msra.mxu0 %v495
    %623 = vmatpush.bf16.msra.mxu0 %v494
    %624 = vmatpush.bf16.msra.mxu0 %v493
    %625 = vmatpush.bf16.msra.mxu0 %v492
    %626 = vmatpush.bf16.msra.mxu0 %v491
    %627 = vmatpush.bf16.msra.mxu0 %v490
    %628 = vmatmul.bf16.gmra.mxu0 %v231
    %v629 = vpop.f32.mrf.mxu0
    %v630 = vadd.f32 %v616, %v629
    %v631 = vpop.f32.mrf.mxu0
    %v632 = vadd.f32 %v618, %v631
    %633 = vdwg.mxu0
    %634 = vmatpush.bf16.msra.mxu0 %v505
    %635 = vmatpush.bf16.msra.mxu0 %v504
    %636 = vmatpush.bf16.msra.mxu0 %v503
    %637 = vmatpush.bf16.msra.mxu0 %v502
    %638 = vmatpush.bf16.msra.mxu0 %v501
    %639 = vmatpush.bf16.msra.mxu0 %v500
    %640 = vmatpush.bf16.msra.mxu0 %v499
    %641 = vmatpush.bf16.msra.mxu0 %v498
    %642 = vmatmul.bf16.gmra.mxu0 %v232
    %v643 = vpop.f32.mrf.mxu0
    %v644 = vadd.f32 %v630, %v643
    %v645 = vpop.f32.mrf.mxu0
    %v646 = vadd.f32 %v632, %v645
    %647 = vdwg.mxu0
    %648 = vmatpush.bf16.msra.mxu0 %v513
    %649 = vmatpush.bf16.msra.mxu0 %v512
    %650 = vmatpush.bf16.msra.mxu0 %v511
    %651 = vmatpush.bf16.msra.mxu0 %v510
    %652 = vmatpush.bf16.msra.mxu0 %v509
    %653 = vmatpush.bf16.msra.mxu0 %v508
    %654 = vmatpush.bf16.msra.mxu0 %v507
    %655 = vmatpush.bf16.msra.mxu0 %v506
    %656 = vmatmul.bf16.gmra.mxu0 %v233
    %v657 = vpop.f32.mrf.mxu0
    %v658 = vadd.f32 %v644, %v657
    %v659 = vpop.f32.mrf.mxu0
    %v660 = vadd.f32 %v646, %v659
    %661 = vdwg.mxu0
    %662 = vmatpush.bf16.msra.mxu0 %v521
    %663 = vmatpush.bf16.msra.mxu0 %v520
    %664 = vmatpush.bf16.msra.mxu0 %v519
    %665 = vmatpush.bf16.msra.mxu0 %v518
    %666 = vmatpush.bf16.msra.mxu0 %v517
    %667 = vmatpush.bf16.msra.mxu0 %v516
    %668 = vmatpush.bf16.msra.mxu0 %v515
    %669 = vmatpush.bf16.msra.mxu0 %v514
    %670 = vmatmul.bf16.gmra.mxu0 %v234
    %v671 = vpop.f32.mrf.mxu0
    %v672 = vadd.f32 %v658, %v671
    %v673 = vpop.f32.mrf.mxu0
    %v674 = vadd.f32 %v660, %v673
    %675 = vdwg.mxu0
    %v676 = vmax.f32 %v672, 0.0
    %v677 = vmax.f32 %v674, 0.0
    %v678 = vpack.c.bf16 %v677, %v676
    %v679 = vld [vmem:[#allocation7] sm:$0xff]
    %v680 = vld [vmem:[#allocation7 + $0x8] sm:$0xff]
    %v681 = vld [vmem:[#allocation7 + $0x10] sm:$0xff]
    %v682 = vld [vmem:[#allocation7 + $0x18] sm:$0xf]
    %v683 = vld [vmem:[#allocation7 + $0x1c] sm:$0xff]
    %v684 = vld [vmem:[#allocation7 + $0x24] sm:$0xff]
    %v685 = vld [vmem:[#allocation7 + $0x2c] sm:$0xff]
    %v686 = vld [vmem:[#allocation7 + $0x34] sm:$0xf]
    %v687 = vld [vmem:[#allocation7 + $0x38] sm:$0xff]
    %v688 = vld [vmem:[#allocation7 + $0x40] sm:$0xff]
    %v689 = vld [vmem:[#allocation7 + $0x48] sm:$0xff]
    %v690 = vld [vmem:[#allocation7 + $0x50] sm:$0xf]
    %v691 = vld [vmem:[#allocation7 + $0x54] sm:$0xff]
    %v692 = vld [vmem:[#allocation7 + $0x5c] sm:$0xff]
    %v693 = vld [vmem:[#allocation7 + $0x64] sm:$0xff]
    %v694 = vld [vmem:[#allocation7 + $0x6c] sm:$0xf]
    %v695 = vld [vmem:[#allocation7 + $0x70] sm:$0xff]
    %v696 = vld [vmem:[#allocation7 + $0x78] sm:$0xff]
    %v697 = vld [vmem:[#allocation7 + $0x80] sm:$0xff]
    %v698 = vld [vmem:[#allocation7 + $0x88] sm:$0xf]
    %v699 = vld [vmem:[#allocation7 + $0x8c] sm:$0xff]
    %v700 = vld [vmem:[#allocation7 + $0x94] sm:$0xff]
    %v701 = vld [vmem:[#allocation7 + $0x9c] sm:$0xff]
    %v702 = vld [vmem:[#allocation7 + $0xa4] sm:$0xf]
    %v703 = vld [vmem:[#allocation7 + $0xa8] sm:$0xff]
    %v704 = vld [vmem:[#allocation7 + $0xb0] sm:$0xff]
    %v705 = vld [vmem:[#allocation7 + $0xb8] sm:$0xff]
    %v706 = vld [vmem:[#allocation7 + $0xc0] sm:$0xf]
    %v707 = vld [vmem:[#allocation7 + $0xc4] sm:$0xff]
    %v708 = vld [vmem:[#allocation7 + $0xcc] sm:$0xff]
    %v709 = vld [vmem:[#allocation7 + $0xd4] sm:$0xff]
    %v710 = vld [vmem:[#allocation7 + $0xdc] sm:$0xf]
    %v711 = vld [vmem:[#allocation7 + $0xe0] sm:$0xff]
    %v712 = vld [vmem:[#allocation7 + $0xe8] sm:$0xff]
    %v713 = vld [vmem:[#allocation7 + $0xf0] sm:$0xff]
    %v714 = vld [vmem:[#allocation7 + $0xf8] sm:$0xf]
    %v715 = vld [vmem:[#allocation7 + $0xfc] sm:$0xff]
    %v716 = vld [vmem:[#allocation7 + $0x104] sm:$0xff]
    %v717 = vld [vmem:[#allocation7 + $0x10c] sm:$0xff]
    %v718 = vld [vmem:[#allocation7 + $0x114] sm:$0xf]
    %v719 = vld [vmem:[#allocation7 + $0x118] sm:$0xff]
    %v720 = vld [vmem:[#allocation7 + $0x120] sm:$0xff]
    %v721 = vld [vmem:[#allocation7 + $0x128] sm:$0xff]
    %v722 = vld [vmem:[#allocation7 + $0x130] sm:$0xf]
    %v723 = vld [vmem:[#allocation7 + $0x134] sm:$0xff]
    %v724 = vld [vmem:[#allocation7 + $0x13c] sm:$0xff]
    %v725 = vld [vmem:[#allocation7 + $0x144] sm:$0xff]
    %v726 = vld [vmem:[#allocation7 + $0x14c] sm:$0xf]
    %v727 = vld [vmem:[#allocation7 + $0x150] sm:$0xff]
    %v728 = vld [vmem:[#allocation7 + $0x158] sm:$0xff]
    %v729 = vld [vmem:[#allocation7 + $0x160] sm:$0xff]
    %v730 = vld [vmem:[#allocation7 + $0x168] sm:$0xf]
    %v731 = vld [vmem:[#allocation7 + $0x16c] sm:$0xff]
    %v732 = vld [vmem:[#allocation7 + $0x174] sm:$0xff]
    %v733 = vld [vmem:[#allocation7 + $0x17c] sm:$0xff]
    %v734 = vld [vmem:[#allocation7 + $0x184] sm:$0xf]
    %v735 = vld [vmem:[#allocation7 + $0x188] sm:$0xff]
    %v736 = vld [vmem:[#allocation7 + $0x190] sm:$0xff]
    %v737 = vld [vmem:[#allocation7 + $0x198] sm:$0xff]
    %v738 = vld [vmem:[#allocation7 + $0x1a0] sm:$0xf]
    %v739 = vld [vmem:[#allocation7 + $0x1a4] sm:$0xff]
    %v740 = vld [vmem:[#allocation7 + $0x1ac] sm:$0xff]
    %v741 = vld [vmem:[#allocation7 + $0x1b4] sm:$0xff]
    %v742 = vld [vmem:[#allocation7 + $0x1bc] sm:$0xf]
    %v743 = vld [vmem:[#allocation8] sm:$0xff]
    %v745 = vperm.slane %v743, 0
    %v746 = vperm.slane %v743, 1
    %v747 = vperm.slane %v743, 2
    %v748 = vperm.slane %v743, 3
    %v749 = vperm.slane %v743, 4
    %v750 = vperm.slane %v743, 5
    %v751 = vperm.slane %v743, 6
    %v823 = vunpack.c.l.b16 %v679
    %v824 = vunpack.c.h.b16 %v679
    %v825 = vunpack.c.l.b16 %v680
    %v826 = vunpack.c.h.b16 %v680
    %v827 = vunpack.c.l.b16 %v681
    %v828 = vunpack.c.h.b16 %v681
    %v829 = vunpack.c.l.b16 %v682
    %v830 = vunpack.c.l.b16 %v683
    %v831 = vunpack.c.h.b16 %v683
    %v832 = vunpack.c.l.b16 %v684
    %v833 = vunpack.c.h.b16 %v684
    %v834 = vunpack.c.l.b16 %v685
    %v835 = vunpack.c.h.b16 %v685
    %v836 = vunpack.c.l.b16 %v686
    %v837 = vunpack.c.l.b16 %v687
    %v838 = vunpack.c.h.b16 %v687
    %v839 = vunpack.c.l.b16 %v688
    %v840 = vunpack.c.h.b16 %v688
    %v841 = vunpack.c.l.b16 %v689
    %v842 = vunpack.c.h.b16 %v689
    %v843 = vunpack.c.l.b16 %v690
    %v844 = vunpack.c.l.b16 %v691
    %v845 = vunpack.c.h.b16 %v691
    %v846 = vunpack.c.l.b16 %v692
    %v847 = vunpack.c.h.b16 %v692
    %v848 = vunpack.c.l.b16 %v693
    %v849 = vunpack.c.h.b16 %v693
    %v850 = vunpack.c.l.b16 %v694
    %v851 = vunpack.c.l.b16 %v695
    %v852 = vunpack.c.h.b16 %v695
    %v853 = vunpack.c.l.b16 %v696
    %v854 = vunpack.c.h.b16 %v696
    %v855 = vunpack.c.l.b16 %v697
    %v856 = vunpack.c.h.b16 %v697
    %v857 = vunpack.c.l.b16 %v698
    %v858 = vunpack.c.l.b16 %v699
    %v859 = vunpack.c.h.b16 %v699
    %v860 = vunpack.c.l.b16 %v700
    %v861 = vunpack.c.h.b16 %v700
    %v862 = vunpack.c.l.b16 %v701
    %v863 = vunpack.c.h.b16 %v701
    %v864 = vunpack.c.l.b16 %v702
    %v865 = vunpack.c.l.b16 %v703
    %v866 = vunpack.c.h.b16 %v703
    %v867 = vunpack.c.l.b16 %v704
    %v868 = vunpack.c.h.b16 %v704
    %v869 = vunpack.c.l.b16 %v705
    %v870 = vunpack.c.h.b16 %v705
    %v871 = vunpack.c.l.b16 %v706
    %v872 = vunpack.c.l.b16 %v707
    %v873 = vunpack.c.h.b16 %v707
    %v874 = vunpack.c.l.b16 %v708
    %v875 = vunpack.c.h.b16 %v708
    %v876 = vunpack.c.l.b16 %v709
    %v877 = vunpack.c.h.b16 %v709
    %v878 = vunpack.c.l.b16 %v710
    %v879 = vunpack.c.l.b16 %v711
    %v880 = vunpack.c.h.b16 %v711
    %v881 = vunpack.c.l.b16 %v712
    %v882 = vunpack.c.h.b16 %v712
    %v883 = vunpack.c.l.b16 %v713
    %v884 = vunpack.c.h.b16 %v713
    %v885 = vunpack.c.l.b16 %v714
    %v886 = vunpack.c.l.b16 %v715
    %v887 = vunpack.c.h.b16 %v715
    %v888 = vunpack.c.l.b16 %v716
    %v889 = vunpack.c.h.b16 %v716
    %v890 = vunpack.c.l.b16 %v717
    %v891 = vunpack.c.h.b16 %v717
    %v892 = vunpack.c.l.b16 %v718
    %v893 = vunpack.c.l.b16 %v719
    %v894 = vunpack.c.h.b16 %v719
    %v895 = vunpack.c.l.b16 %v720
    %v896 = vunpack.c.h.b16 %v720
    %v897 = vunpack.c.l.b16 %v721
    %v898 = vunpack.c.h.b16 %v721
    %v899 = vunpack.c.l.b16 %v722
    %v900 = vunpack.c.l.b16 %v723
    %v901 = vunpack.c.h.b16 %v723
    %v902 = vunpack.c.l.b16 %v724
    %v903 = vunpack.c.h.b16 %v724
    %v904 = vunpack.c.l.b16 %v725
    %v905 = vunpack.c.h.b16 %v725
    %v906 = vunpack.c.l.b16 %v726
    %v907 = vunpack.c.l.b16 %v727
    %v908 = vunpack.c.h.b16 %v727
    %v909 = vunpack.c.l.b16 %v728
    %v910 = vunpack.c.h.b16 %v728
    %v911 = vunpack.c.l.b16 %v729
    %v912 = vunpack.c.h.b16 %v729
    %v913 = vunpack.c.l.b16 %v730
    %v914 = vunpack.c.l.b16 %v731
    %v915 = vunpack.c.h.b16 %v731
    %v916 = vunpack.c.l.b16 %v732
    %v917 = vunpack.c.h.b16 %v732
    %v918 = vunpack.c.l.b16 %v733
    %v919 = vunpack.c.h.b16 %v733
    %v920 = vunpack.c.l.b16 %v734
    %v921 = vunpack.c.l.b16 %v735
    %v922 = vunpack.c.h.b16 %v735
    %v923 = vunpack.c.l.b16 %v736
    %v924 = vunpack.c.h.b16 %v736
    %v925 = vunpack.c.l.b16 %v737
    %v926 = vunpack.c.h.b16 %v737
    %v927 = vunpack.c.l.b16 %v738
    %v928 = vunpack.c.l.b16 %v739
    %v929 = vunpack.c.h.b16 %v739
    %v930 = vunpack.c.l.b16 %v740
    %v931 = vunpack.c.h.b16 %v740
    %v932 = vunpack.c.l.b16 %v741
    %v933 = vunpack.c.h.b16 %v741
    %v934 = vunpack.c.l.b16 %v742
    %v935 = vpack.c.b16 %v830, %v823
    %v936 = vpack.c.b16 %v831, %v824
    %v937 = vpack.c.b16 %v832, %v825
    %v938 = vpack.c.b16 %v833, %v826
    %v939 = vpack.c.b16 %v834, %v827
    %v940 = vpack.c.b16 %v835, %v828
    %v941 = vpack.c.b16 %v836, %v829
    %v942 = vpack.c.b16 %v844, %v837
    %v943 = vpack.c.b16 %v845, %v838
    %v944 = vpack.c.b16 %v846, %v839
    %v945 = vpack.c.b16 %v847, %v840
    %v946 = vpack.c.b16 %v848, %v841
    %v947 = vpack.c.b16 %v849, %v842
    %v948 = vpack.c.b16 %v850, %v843
    %v949 = vpack.c.b16 %v858, %v851
    %v950 = vpack.c.b16 %v859, %v852
    %v951 = vpack.c.b16 %v860, %v853
    %v952 = vpack.c.b16 %v861, %v854
    %v953 = vpack.c.b16 %v862, %v855
    %v954 = vpack.c.b16 %v863, %v856
    %v955 = vpack.c.b16 %v864, %v857
    %v956 = vpack.c.b16 %v872, %v865
    %v957 = vpack.c.b16 %v873, %v866
    %v958 = vpack.c.b16 %v874, %v867
    %v959 = vpack.c.b16 %v875, %v868
    %v960 = vpack.c.b16 %v876, %v869
    %v961 = vpack.c.b16 %v877, %v870
    %v962 = vpack.c.b16 %v878, %v871
    %v963 = vpack.c.b16 %v886, %v879
    %v964 = vpack.c.b16 %v887, %v880
    %v965 = vpack.c.b16 %v888, %v881
    %v966 = vpack.c.b16 %v889, %v882
    %v967 = vpack.c.b16 %v890, %v883
    %v968 = vpack.c.b16 %v891, %v884
    %v969 = vpack.c.b16 %v892, %v885
    %v970 = vpack.c.b16 %v900, %v893
    %v971 = vpack.c.b16 %v901, %v894
    %v972 = vpack.c.b16 %v902, %v895
    %v973 = vpack.c.b16 %v903, %v896
    %v974 = vpack.c.b16 %v904, %v897
    %v975 = vpack.c.b16 %v905, %v898
    %v976 = vpack.c.b16 %v906, %v899
    %v977 = vpack.c.b16 %v914, %v907
    %v978 = vpack.c.b16 %v915, %v908
    %v979 = vpack.c.b16 %v916, %v909
    %v980 = vpack.c.b16 %v917, %v910
    %v981 = vpack.c.b16 %v918, %v911
    %v982 = vpack.c.b16 %v919, %v912
    %v983 = vpack.c.b16 %v920, %v913
    %v984 = vpack.c.b16 %v928, %v921
    %v985 = vpack.c.b16 %v929, %v922
    %v986 = vpack.c.b16 %v930, %v923
    %v987 = vpack.c.b16 %v931, %v924
    %v988 = vpack.c.b16 %v932, %v925
    %v989 = vpack.c.b16 %v933, %v926
    %v990 = vpack.c.b16 %v934, %v927
    %1047 = vmatpush.bf16.msra.mxu0 %v984
    %1048 = vmatpush.bf16.msra.mxu0 %v977
    %1049 = vmatpush.bf16.msra.mxu0 %v970
    %1050 = vmatpush.bf16.msra.mxu0 %v963
    %1051 = vmatpush.bf16.msra.mxu0 %v956
    %1052 = vmatpush.bf16.msra.mxu0 %v949
    %1053 = vmatpush.bf16.msra.mxu0 %v942
    %1054 = vmatpush.bf16.msra.mxu0 %v935
    %1055 = vmatmul.bf16.gmra.mxu0 %v678
    %v1056 = vpop.f32.mrf.mxu0
    %v1057 = vadd.f32 %v745, %v1056
    %v1058 = vpop.f32.mrf.mxu0
    %v1059 = vadd.f32 %v745, %v1058
    %1060 = vdwg.mxu0
    %1061 = vmatpush.bf16.msra.mxu0 %v985
    %1062 = vmatpush.bf16.msra.mxu0 %v978
    %1063 = vmatpush.bf16.msra.mxu0 %v971
    %1064 = vmatpush.bf16.msra.mxu0 %v964
    %1065 = vmatpush.bf16.msra.mxu0 %v957
    %1066 = vmatpush.bf16.msra.mxu0 %v950
    %1067 = vmatpush.bf16.msra.mxu0 %v943
    %1068 = vmatpush.bf16.msra.mxu0 %v936
    %1069 = vmatmul.bf16.gmra.mxu0 %v678
    %v1070 = vpop.f32.mrf.mxu0
    %v1071 = vadd.f32 %v746, %v1070
    %v1072 = vpop.f32.mrf.mxu0
    %v1073 = vadd.f32 %v746, %v1072
    %1074 = vdwg.mxu0
    %1075 = vmatpush.bf16.msra.mxu0 %v986
    %1076 = vmatpush.bf16.msra.mxu0 %v979
    %1077 = vmatpush.bf16.msra.mxu0 %v972
    %1078 = vmatpush.bf16.msra.mxu0 %v965
    %1079 = vmatpush.bf16.msra.mxu0 %v958
    %1080 = vmatpush.bf16.msra.mxu0 %v951
    %1081 = vmatpush.bf16.msra.mxu0 %v944
    %1082 = vmatpush.bf16.msra.mxu0 %v937
    %1083 = vmatmul.bf16.gmra.mxu0 %v678
    %v1084 = vpop.f32.mrf.mxu0
    %v1085 = vadd.f32 %v747, %v1084
    %v1086 = vpop.f32.mrf.mxu0
    %v1087 = vadd.f32 %v747, %v1086
    %1088 = vdwg.mxu0
    %1089 = vmatpush.bf16.msra.mxu0 %v987
    %1090 = vmatpush.bf16.msra.mxu0 %v980
    %1091 = vmatpush.bf16.msra.mxu0 %v973
    %1092 = vmatpush.bf16.msra.mxu0 %v966
    %1093 = vmatpush.bf16.msra.mxu0 %v959
    %1094 = vmatpush.bf16.msra.mxu0 %v952
    %1095 = vmatpush.bf16.msra.mxu0 %v945
    %1096 = vmatpush.bf16.msra.mxu0 %v938
    %1097 = vmatmul.bf16.gmra.mxu0 %v678
    %v1098 = vpop.f32.mrf.mxu0
    %v1099 = vadd.f32 %v748, %v1098
    %v1100 = vpop.f32.mrf.mxu0
    %v1101 = vadd.f32 %v748, %v1100
    %1102 = vdwg.mxu0
    %1103 = vmatpush.bf16.msra.mxu0 %v988
    %1104 = vmatpush.bf16.msra.mxu0 %v981
    %1105 = vmatpush.bf16.msra.mxu0 %v974
    %1106 = vmatpush.bf16.msra.mxu0 %v967
    %1107 = vmatpush.bf16.msra.mxu0 %v960
    %1108 = vmatpush.bf16.msra.mxu0 %v953
    %1109 = vmatpush.bf16.msra.mxu0 %v946
    %1110 = vmatpush.bf16.msra.mxu0 %v939
    %1111 = vmatmul.bf16.gmra.mxu0 %v678
    %v1112 = vpop.f32.mrf.mxu0
    %v1113 = vadd.f32 %v749, %v1112
    %v1114 = vpop.f32.mrf.mxu0
    %v1115 = vadd.f32 %v749, %v1114
    %1116 = vdwg.mxu0
    %1117 = vmatpush.bf16.msra.mxu0 %v989
    %1118 = vmatpush.bf16.msra.mxu0 %v982
    %1119 = vmatpush.bf16.msra.mxu0 %v975
    %1120 = vmatpush.bf16.msra.mxu0 %v968
    %1121 = vmatpush.bf16.msra.mxu0 %v961
    %1122 = vmatpush.bf16.msra.mxu0 %v954
    %1123 = vmatpush.bf16.msra.mxu0 %v947
    %1124 = vmatpush.bf16.msra.mxu0 %v940
    %1125 = vmatmul.bf16.gmra.mxu0 %v678
    %v1126 = vpop.f32.mrf.mxu0
    %v1127 = vadd.f32 %v750, %v1126
    %v1128 = vpop.f32.mrf.mxu0
    %v1129 = vadd.f32 %v750, %v1128
    %1130 = vdwg.mxu0
    %1131 = vmatpush.bf16.msra.mxu0 %v990
    %1132 = vmatpush.bf16.msra.mxu0 %v983
    %1133 = vmatpush.bf16.msra.mxu0 %v976
    %1134 = vmatpush.bf16.msra.mxu0 %v969
    %1135 = vmatpush.bf16.msra.mxu0 %v962
    %1136 = vmatpush.bf16.msra.mxu0 %v955
    %1137 = vmatpush.bf16.msra.mxu0 %v948
    %1138 = vmatpush.bf16.msra.mxu0 %v941
    %1139 = vmatmul.bf16.gmra.mxu0 %v678
    %v1140 = vpop.f32.mrf.mxu0
    %v1141 = vadd.f32 %v751, %v1140
    %v1142 = vpop.f32.mrf.mxu0
    %v1143 = vadd.f32 %v751, %v1142
    %1144 = vdwg.mxu0
    %v1145 = vxor.u32 %v1057, 2147483648
    %v1146 = vxor.u32 %v1071, 2147483648
    %v1147 = vxor.u32 %v1085, 2147483648
    %v1148 = vxor.u32 %v1099, 2147483648
    %v1149 = vxor.u32 %v1113, 2147483648
    %v1150 = vxor.u32 %v1127, 2147483648
    %v1151 = vxor.u32 %v1141, 2147483648
    %v1152 = vxor.u32 %v1059, 2147483648
    %v1153 = vxor.u32 %v1073, 2147483648
    %v1154 = vxor.u32 %v1087, 2147483648
    %v1155 = vxor.u32 %v1101, 2147483648
    %v1156 = vxor.u32 %v1115, 2147483648
    %v1157 = vxor.u32 %v1129, 2147483648
    %v1158 = vxor.u32 %v1143, 2147483648
    %v1159 = vmul.f32 %v1145, 1.442695
    %v1160 = vpow.pop %v1159
    %v1161 = vmul.f32 %v1146, 1.442695
    %v1162 = vpow.pop %v1161
    %v1163 = vmul.f32 %v1147, 1.442695
    %v1164 = vpow.pop %v1163
    %v1165 = vmul.f32 %v1148, 1.442695
    %v1166 = vpow.pop %v1165
    %v1167 = vmul.f32 %v1149, 1.442695
    %v1168 = vpow.pop %v1167
    %v1169 = vmul.f32 %v1150, 1.442695
    %v1170 = vpow.pop %v1169
    %v1171 = vmul.f32 %v1151, 1.442695
    %v1172 = vpow.pop %v1171
    %v1173 = vmul.f32 %v1152, 1.442695
    %v1174 = vpow.pop %v1173
    %v1175 = vmul.f32 %v1153, 1.442695
    %v1176 = vpow.pop %v1175
    %v1177 = vmul.f32 %v1154, 1.442695
    %v1178 = vpow.pop %v1177
    %v1179 = vmul.f32 %v1155, 1.442695
    %v1180 = vpow.pop %v1179
    %v1181 = vmul.f32 %v1156, 1.442695
    %v1182 = vpow.pop %v1181
    %v1183 = vmul.f32 %v1157, 1.442695
    %v1184 = vpow.pop %v1183
    %v1185 = vmul.f32 %v1158, 1.442695
    %v1186 = vpow.pop %v1185
    %v1187 = vadd.f32 %v1160, 1.0
    %v1188 = vadd.f32 %v1162, 1.0
    %v1189 = vadd.f32 %v1164, 1.0
    %v1190 = vadd.f32 %v1166, 1.0
    %v1191 = vadd.f32 %v1168, 1.0
    %v1192 = vadd.f32 %v1170, 1.0
    %v1193 = vadd.f32 %v1172, 1.0
    %v1194 = vadd.f32 %v1174, 1.0
    %v1195 = vadd.f32 %v1176, 1.0
    %v1196 = vadd.f32 %v1178, 1.0
    %v1197 = vadd.f32 %v1180, 1.0
    %v1198 = vadd.f32 %v1182, 1.0
    %v1199 = vadd.f32 %v1184, 1.0
    %v1200 = vadd.f32 %v1186, 1.0
    %v1201 = vrcp.pop %v1187
    %v1202 = vmul.f32 %v1187, %v1201
    %v1203 = vsub.f32 1.0, %v1202
    %v1204 = vmul.f32 %v1201, %v1203
    %v1205 = vadd.f32 %v1201, %v1204
    %vm1206 = vweird.f32 %v1187
    %vm1207 = vweird.f32 %v1201
    %vm1208 = vmor %vm1206, %vm1207
    %v1209 = vsel %vm1208, %v1201, %v1205
    %v1210 = vand.u32 2147483647, %v1187
    %vm1211 = vcmp.eq.f32.partialorder %v1210, 8.507059e+37
    %v1212 = vand.u32 %v1187, 2147483648
    %v1213 = vor.u32 1.1754944e-38, %v1212
    %v1214 = vsel %vm1211, %v1213, %v1209
    %v1215 = vmul.f32 1.0, %v1214
    %v1216 = vrcp.pop %v1188
    %v1217 = vmul.f32 %v1188, %v1216
    %v1218 = vsub.f32 1.0, %v1217
    %v1219 = vmul.f32 %v1216, %v1218
    %v1220 = vadd.f32 %v1216, %v1219
    %vm1221 = vweird.f32 %v1188
    %vm1222 = vweird.f32 %v1216
    %vm1223 = vmor %vm1221, %vm1222
    %v1224 = vsel %vm1223, %v1216, %v1220
    %v1225 = vand.u32 2147483647, %v1188
    %vm1226 = vcmp.eq.f32.partialorder %v1225, 8.507059e+37
    %v1227 = vand.u32 %v1188, 2147483648
    %v1228 = vor.u32 1.1754944e-38, %v1227
    %v1229 = vsel %vm1226, %v1228, %v1224
    %v1230 = vmul.f32 1.0, %v1229
    %v1231 = vrcp.pop %v1189
    %v1232 = vmul.f32 %v1189, %v1231
    %v1233 = vsub.f32 1.0, %v1232
    %v1234 = vmul.f32 %v1231, %v1233
    %v1235 = vadd.f32 %v1231, %v1234
    %vm1236 = vweird.f32 %v1189
    %vm1237 = vweird.f32 %v1231
    %vm1238 = vmor %vm1236, %vm1237
    %v1239 = vsel %vm1238, %v1231, %v1235
    %v1240 = vand.u32 2147483647, %v1189
    %vm1241 = vcmp.eq.f32.partialorder %v1240, 8.507059e+37
    %v1242 = vand.u32 %v1189, 2147483648
    %v1243 = vor.u32 1.1754944e-38, %v1242
    %v1244 = vsel %vm1241, %v1243, %v1239
    %v1245 = vmul.f32 1.0, %v1244
    %v1246 = vrcp.pop %v1190
    %v1247 = vmul.f32 %v1190, %v1246
    %v1248 = vsub.f32 1.0, %v1247
    %v1249 = vmul.f32 %v1246, %v1248
    %v1250 = vadd.f32 %v1246, %v1249
    %vm1251 = vweird.f32 %v1190
    %vm1252 = vweird.f32 %v1246
    %vm1253 = vmor %vm1251, %vm1252
    %v1254 = vsel %vm1253, %v1246, %v1250
    %v1255 = vand.u32 2147483647, %v1190
    %vm1256 = vcmp.eq.f32.partialorder %v1255, 8.507059e+37
    %v1257 = vand.u32 %v1190, 2147483648
    %v1258 = vor.u32 1.1754944e-38, %v1257
    %v1259 = vsel %vm1256, %v1258, %v1254
    %v1260 = vmul.f32 1.0, %v1259
    %v1261 = vrcp.pop %v1191
    %v1262 = vmul.f32 %v1191, %v1261
    %v1263 = vsub.f32 1.0, %v1262
    %v1264 = vmul.f32 %v1261, %v1263
    %v1265 = vadd.f32 %v1261, %v1264
    %vm1266 = vweird.f32 %v1191
    %vm1267 = vweird.f32 %v1261
    %vm1268 = vmor %vm1266, %vm1267
    %v1269 = vsel %vm1268, %v1261, %v1265
    %v1270 = vand.u32 2147483647, %v1191
    %vm1271 = vcmp.eq.f32.partialorder %v1270, 8.507059e+37
    %v1272 = vand.u32 %v1191, 2147483648
    %v1273 = vor.u32 1.1754944e-38, %v1272
    %v1274 = vsel %vm1271, %v1273, %v1269
    %v1275 = vmul.f32 1.0, %v1274
    %v1276 = vrcp.pop %v1192
    %v1277 = vmul.f32 %v1192, %v1276
    %v1278 = vsub.f32 1.0, %v1277
    %v1279 = vmul.f32 %v1276, %v1278
    %v1280 = vadd.f32 %v1276, %v1279
    %vm1281 = vweird.f32 %v1192
    %vm1282 = vweird.f32 %v1276
    %vm1283 = vmor %vm1281, %vm1282
    %v1284 = vsel %vm1283, %v1276, %v1280
    %v1285 = vand.u32 2147483647, %v1192
    %vm1286 = vcmp.eq.f32.partialorder %v1285, 8.507059e+37
    %v1287 = vand.u32 %v1192, 2147483648
    %v1288 = vor.u32 1.1754944e-38, %v1287
    %v1289 = vsel %vm1286, %v1288, %v1284
    %v1290 = vmul.f32 1.0, %v1289
    %v1291 = vrcp.pop %v1193
    %v1292 = vmul.f32 %v1193, %v1291
    %v1293 = vsub.f32 1.0, %v1292
    %v1294 = vmul.f32 %v1291, %v1293
    %v1295 = vadd.f32 %v1291, %v1294
    %vm1296 = vweird.f32 %v1193
    %vm1297 = vweird.f32 %v1291
    %vm1298 = vmor %vm1296, %vm1297
    %v1299 = vsel %vm1298, %v1291, %v1295
    %v1300 = vand.u32 2147483647, %v1193
    %vm1301 = vcmp.eq.f32.partialorder %v1300, 8.507059e+37
    %v1302 = vand.u32 %v1193, 2147483648
    %v1303 = vor.u32 1.1754944e-38, %v1302
    %v1304 = vsel %vm1301, %v1303, %v1299
    %v1305 = vmul.f32 1.0, %v1304
    %v1306 = vrcp.pop %v1194
    %v1307 = vmul.f32 %v1194, %v1306
    %v1308 = vsub.f32 1.0, %v1307
    %v1309 = vmul.f32 %v1306, %v1308
    %v1310 = vadd.f32 %v1306, %v1309
    %vm1311 = vweird.f32 %v1194
    %vm1312 = vweird.f32 %v1306
    %vm1313 = vmor %vm1311, %vm1312
    %v1314 = vsel %vm1313, %v1306, %v1310
    %v1315 = vand.u32 2147483647, %v1194
    %vm1316 = vcmp.eq.f32.partialorder %v1315, 8.507059e+37
    %v1317 = vand.u32 %v1194, 2147483648
    %v1318 = vor.u32 1.1754944e-38, %v1317
    %v1319 = vsel %vm1316, %v1318, %v1314
    %v1320 = vmul.f32 1.0, %v1319
    %v1321 = vrcp.pop %v1195
    %v1322 = vmul.f32 %v1195, %v1321
    %v1323 = vsub.f32 1.0, %v1322
    %v1324 = vmul.f32 %v1321, %v1323
    %v1325 = vadd.f32 %v1321, %v1324
    %vm1326 = vweird.f32 %v1195
    %vm1327 = vweird.f32 %v1321
    %vm1328 = vmor %vm1326, %vm1327
    %v1329 = vsel %vm1328, %v1321, %v1325
    %v1330 = vand.u32 2147483647, %v1195
    %vm1331 = vcmp.eq.f32.partialorder %v1330, 8.507059e+37
    %v1332 = vand.u32 %v1195, 2147483648
    %v1333 = vor.u32 1.1754944e-38, %v1332
    %v1334 = vsel %vm1331, %v1333, %v1329
    %v1335 = vmul.f32 1.0, %v1334
    %v1336 = vrcp.pop %v1196
    %v1337 = vmul.f32 %v1196, %v1336
    %v1338 = vsub.f32 1.0, %v1337
    %v1339 = vmul.f32 %v1336, %v1338
    %v1340 = vadd.f32 %v1336, %v1339
    %vm1341 = vweird.f32 %v1196
    %vm1342 = vweird.f32 %v1336
    %vm1343 = vmor %vm1341, %vm1342
    %v1344 = vsel %vm1343, %v1336, %v1340
    %v1345 = vand.u32 2147483647, %v1196
    %vm1346 = vcmp.eq.f32.partialorder %v1345, 8.507059e+37
    %v1347 = vand.u32 %v1196, 2147483648
    %v1348 = vor.u32 1.1754944e-38, %v1347
    %v1349 = vsel %vm1346, %v1348, %v1344
    %v1350 = vmul.f32 1.0, %v1349
    %v1351 = vrcp.pop %v1197
    %v1352 = vmul.f32 %v1197, %v1351
    %v1353 = vsub.f32 1.0, %v1352
    %v1354 = vmul.f32 %v1351, %v1353
    %v1355 = vadd.f32 %v1351, %v1354
    %vm1356 = vweird.f32 %v1197
    %vm1357 = vweird.f32 %v1351
    %vm1358 = vmor %vm1356, %vm1357
    %v1359 = vsel %vm1358, %v1351, %v1355
    %v1360 = vand.u32 2147483647, %v1197
    %vm1361 = vcmp.eq.f32.partialorder %v1360, 8.507059e+37
    %v1362 = vand.u32 %v1197, 2147483648
    %v1363 = vor.u32 1.1754944e-38, %v1362
    %v1364 = vsel %vm1361, %v1363, %v1359
    %v1365 = vmul.f32 1.0, %v1364
    %v1366 = vrcp.pop %v1198
    %v1367 = vmul.f32 %v1198, %v1366
    %v1368 = vsub.f32 1.0, %v1367
    %v1369 = vmul.f32 %v1366, %v1368
    %v1370 = vadd.f32 %v1366, %v1369
    %vm1371 = vweird.f32 %v1198
    %vm1372 = vweird.f32 %v1366
    %vm1373 = vmor %vm1371, %vm1372
    %v1374 = vsel %vm1373, %v1366, %v1370
    %v1375 = vand.u32 2147483647, %v1198
    %vm1376 = vcmp.eq.f32.partialorder %v1375, 8.507059e+37
    %v1377 = vand.u32 %v1198, 2147483648
    %v1378 = vor.u32 1.1754944e-38, %v1377
    %v1379 = vsel %vm1376, %v1378, %v1374
    %v1380 = vmul.f32 1.0, %v1379
    %v1381 = vrcp.pop %v1199
    %v1382 = vmul.f32 %v1199, %v1381
    %v1383 = vsub.f32 1.0, %v1382
    %v1384 = vmul.f32 %v1381, %v1383
    %v1385 = vadd.f32 %v1381, %v1384
    %vm1386 = vweird.f32 %v1199
    %vm1387 = vweird.f32 %v1381
    %vm1388 = vmor %vm1386, %vm1387
    %v1389 = vsel %vm1388, %v1381, %v1385
    %v1390 = vand.u32 2147483647, %v1199
    %vm1391 = vcmp.eq.f32.partialorder %v1390, 8.507059e+37
    %v1392 = vand.u32 %v1199, 2147483648
    %v1393 = vor.u32 1.1754944e-38, %v1392
    %v1394 = vsel %vm1391, %v1393, %v1389
    %v1395 = vmul.f32 1.0, %v1394
    %v1396 = vrcp.pop %v1200
    %v1397 = vmul.f32 %v1200, %v1396
    %v1398 = vsub.f32 1.0, %v1397
    %v1399 = vmul.f32 %v1396, %v1398
    %v1400 = vadd.f32 %v1396, %v1399
    %vm1401 = vweird.f32 %v1200
    %vm1402 = vweird.f32 %v1396
    %vm1403 = vmor %vm1401, %vm1402
    %v1404 = vsel %vm1403, %v1396, %v1400
    %v1405 = vand.u32 2147483647, %v1200
    %vm1406 = vcmp.eq.f32.partialorder %v1405, 8.507059e+37
    %v1407 = vand.u32 %v1200, 2147483648
    %v1408 = vor.u32 1.1754944e-38, %v1407
    %v1409 = vsel %vm1406, %v1408, %v1404
    %v1410 = vmul.f32 1.0, %v1409
    %1411 = vst [vmem:[#allocation10] sm:$0xff] %v1215
    %1412 = vst [vmem:[#allocation10 + $0x8] sm:$0xff] %v1230
    %1413 = vst [vmem:[#allocation10 + $0x10] sm:$0xff] %v1245
    %1414 = vst [vmem:[#allocation10 + $0x18] sm:$0xff] %v1260
    %1415 = vst [vmem:[#allocation10 + $0x20] sm:$0xff] %v1275
    %1416 = vst [vmem:[#allocation10 + $0x28] sm:$0xff] %v1290
    %1417 = vst [vmem:[#allocation10 + $0x30] sm:$0xff] %v1305
    %1418 = vst [vmem:[#allocation10 + $0x38] sm:$0xff] %v1320
    %1419 = vst [vmem:[#allocation10 + $0x40] sm:$0xff] %v1335
    %1420 = vst [vmem:[#allocation10 + $0x48] sm:$0xff] %v1350
    %1421 = vst [vmem:[#allocation10 + $0x50] sm:$0xff] %v1365
    %1422 = vst [vmem:[#allocation10 + $0x58] sm:$0xff] %v1380
    %1423 = vst [vmem:[#allocation10 + $0x60] sm:$0xff] %v1395
    %1424 = vst [vmem:[#allocation10 + $0x68] sm:$0xff] %v1410
    // Predicated region
    $region38: #{tpu_custom_call.1} parent=1 // pred_check
      _
    $region39: #{tpu_custom_call.1} parent=1 // pred_check_branch
      %1426 = sbr.rel (0) target = $region41
    $region40: #{tpu_custom_call.1} parent=1 // pred_region
      %1428 = vsyncadd [#allocation4], 0
      %s1429 = sshll.u32 [#allocation10], 4
      %s1430 = int_to_ptr.vmem [resolvable:$true] %s1429
      %s1431 = sshll.u32 %s5, 4
      %s1432 = int_to_ptr.hbm [resolvable:$true] %s1431
      %1437 = dma.vmem_to_hbm [thread:$0]  %s1430, 1792, %s1432, [#allocation4], 896, 896, 56
    $region41: #{tpu_custom_call.1} parent=1 // pred_fallthru
      _
    // Predicated region
    $region42: #{tpu_custom_call.1} parent=1 // pred_check
      _
    $region43: #{tpu_custom_call.1} parent=1 // pred_check_branch
      %1439 = sbr.rel (0) target = $region45
    $region44: #{tpu_custom_call.1} parent=1 // pred_region
      %1441 = dma.done [#allocation4], 1792
    $region45: #{tpu_custom_call.1} parent=1 // pred_fallthru
      _
    %1442 = vsyncpa [#allocation3], 1
    %1443 = vsyncpa [#allocation6], 1
    %1444 = vsyncpa [#allocation9], 1
    %1445 = vsyncpa [#allocation4], 1

</llo_original>
